<compile_context>
chip_gen: v5e
topology: v5e:2x2
jax: 0.10.0
libtpu: 0.0.40
codegen_flags: <defaults>
</compile_context>

<pallas_src>
import math

import jax
import jax.numpy as jnp
from jax.experimental import pallas as pl
from jax.experimental.pallas import tpu as pltpu


def _layer_norm(x, gamma, beta, eps=1e-5):
    mean = jnp.mean(x, axis=-1, keepdims=True)
    var = jnp.mean(jnp.square(x - mean), axis=-1, keepdims=True)
    return (x - mean) * jax.lax.rsqrt(var + eps) * gamma + beta


def _vmem_limit_bytes():
    """Scoped VMEM limit: 3/4 of physical capacity, capped at 96 MiB."""
    try:
        cap = int(pltpu.get_tpu_info().vmem_capacity_bytes)
    except Exception:
        cap = 64 * 1024 * 1024
    return min(int(cap * 3 // 4), 96 * 1024 * 1024)


# ------------------------- tile-size helpers --------------------------------

def _patch_tile(NP, B, target_rows=512):
    """Patch groups per embed tile (rows per tile = TP*B)."""
    if NP * B <= target_rows:
        return NP
    for tp in range(NP - 1, 0, -1):
        if NP % tp == 0 and tp % 8 == 0 and tp * B <= target_rows:
            return tp
    return NP


def _group_tile(S, B, target_rows=512):
    """Token groups per encoder tile (rows = TS*B).

    Prefers a split into >=2 tiles (so the 'parallel' row axis feeds both
    v7x TensorCores) while keeping TM a multiple of 8; falls back to the
    full extent when no valid divisor exists (small demo shapes)."""
    cands = [t for t in range(1, S) if S % t == 0 and (t * B) % 8 == 0]
    if not cands:
        return S
    under = [t for t in cands if t * B <= target_rows]
    return max(under) if under else min(cands)


def _mlp_chunk(MLP, target=512):
    """Hidden-dim chunk (multiple of 128, or full) for the MLP."""
    if MLP <= target:
        return MLP
    ch = (target // 128) * 128
    while ch >= 128:
        if MLP % ch == 0:
            return ch
        ch -= 128
    return MLP


def _final_tile(S, B, D, budget_bytes=4 * 1024 * 1024):
    """Token-groups per tile for the final LayerNorm+mean kernel."""
    best = 1
    for t in range(1, S + 1):
        if S % t == 0 and t * B * D * 4 <= budget_bytes:
            best = t
    return best


# ------------- patch embedding: stride==kernel Conv2d == patch matmul -------

def extract_patches(x, p):
    # glue: pure reshape/transpose (no compute), NCHW -> [B, num_patches, C*p*p]
    B, C, H, W = x.shape
    Hp, Wp = H // p, W // p
    x = x.reshape(B, C, Hp, p, Wp, p)
    x = x.transpose(0, 2, 4, 1, 3, 5)
    return x.reshape(B, Hp * Wp, C * p * p)


def _embed_kernel(x_ref, w_ref, b_ref, pos_ref, o_ref):
    # bf16 MXU matmul with f32 accumulation; bias + positional embedding fused.
    y = jnp.dot(x_ref[...], w_ref[...],
                preferred_element_type=jnp.float32) + b_ref[...]
    TP, D = pos_ref.shape
    TM = y.shape[0]
    Bq = TM // TP
    # rows are (patch major, image minor): broadcast pos row p over the B images
    pos = jnp.broadcast_to(pos_ref[...][:, None, :], (TP, Bq, D)).reshape(TM, D)
    o_ref[...] = (y + pos).astype(o_ref.dtype)


def make_patch_embed_fn(NP, B, K, D, TP):
    M, TM = NP * B, TP * B
    return pl.pallas_call(
        _embed_kernel,
        out_shape=jax.ShapeDtypeStruct((M, D), jnp.bfloat16),
        grid=(NP // TP,),
        in_specs=[pl.BlockSpec((TM, K), lambda i: (i, 0)),
                  pl.BlockSpec((K, D), lambda i: (0, 0)),
                  pl.BlockSpec((1, D), lambda i: (0, 0)),
                  pl.BlockSpec((TP, D), lambda i: (i, 0))],
        out_specs=pl.BlockSpec((TM, D), lambda i: (i, 0)),
        compiler_params=pltpu.CompilerParams(
            dimension_semantics=("parallel",)),
    )


# --------------- full encoder stack as a single pallas_call -----------------
# grid = (row_tiles, num_layers); activations live in a VMEM scratch across
# the layer axis, per-layer weights stream in via the layer grid index.

def make_encoder_stack_fn(S, B, D, NH, MLP, NL, TS, vmem_limit):
    HD = D // NH
    TM = TS * B          # rows per tile (TS whole attention groups of B rows)
    R = S * B
    num_i = S // TS
    CH = _mlp_chunk(MLP)
    NCH = MLP // CH

    def kernel(x_ref, wqkv_ref, bqkv_ref, wo_ref, bo_ref,
               g1_ref, be1_ref, w1_ref, b1_ref, w2_ref, b2_ref,
               g2_ref, be2_ref, o_ref, h_ref):
        l = pl.program_id(1)

        @pl.when(l == 0)
        def _():
            h_ref[...] = x_ref[...].astype(jnp.float32)   # activation -> VMEM

        x = h_ref[...]                                    # (TM, D) f32
        xb = x.astype(jnp.bfloat16)

        # fused QKV projection (one [D,3D] bf16 MXU matmul, f32 accumulate);
        # the 1/sqrt(HD) scale is already folded into the Q columns.
        qkv = jnp.dot(xb, wqkv_ref[...],
                      preferred_element_type=jnp.float32) + bqkv_ref[...]
        qkv3 = qkv.reshape(TS, B, 3 * D)

        # block-diagonal attention: every token index s attends only over the
        # B images (batch_first=False semantics) -> batched BxB attention,
        # no [R,R] scores, no mask.  Per-head context is folded directly into
        # the output projection, so there are no per-head scratch stores and
        # only one (TM, D) f32 accumulator stays live across the head loop.
        attn = None
        for h in range(NH):
            qh = qkv3[:, :, h * HD:(h + 1) * HD].astype(jnp.bfloat16)
            kh = qkv3[:, :, D + h * HD:D + (h + 1) * HD].astype(jnp.bfloat16)
            vh = qkv3[:, :, 2 * D + h * HD:2 * D + (h + 1) * HD].astype(jnp.bfloat16)
            s = jnp.einsum('sid,sjd->sij', qh, kh,
                           preferred_element_type=jnp.float32)        # (TS,B,B)
            m = jnp.max(s, axis=-1, keepdims=True)
            p = jnp.exp(s - m)
            p = p * pl.reciprocal(jnp.sum(p, axis=-1, keepdims=True),
                                  approx=False)
            ctx = jnp.einsum('sij,sjd->sid', p.astype(jnp.bfloat16), vh,
                             preferred_element_type=jnp.float32)      # (TS,B,HD)
            part = jnp.dot(ctx.reshape(TM, HD).astype(jnp.bfloat16),
                           wo_ref[h * HD:(h + 1) * HD, :],
                           preferred_element_type=jnp.float32)        # (TM, D)
            attn = part if attn is None else attn + part
        attn = attn + bo_ref[...]

        # post-norm residual blocks (norm_first=False); dropout == identity
        y = _layer_norm(x + attn, g1_ref[...], be1_ref[...])
        yb = y.astype(jnp.bfloat16)

        # MLP, chunked along the hidden dim to bound the live f32 hmid buffer
        # (peak-VMEM guard for v7x's 64 MiB at large TM / MLP).
        z = jnp.zeros((TM, D), jnp.float32)
        for c in range(NCH):
            c0 = c * CH
            hmid = jnp.maximum(
                jnp.dot(yb, w1_ref[:, c0:c0 + CH],
                        preferred_element_type=jnp.float32)
                + b1_ref[:, c0:c0 + CH], 0.0)
            z = z + jnp.dot(hmid.astype(jnp.bfloat16), w2_ref[c0:c0 + CH, :],
                            preferred_element_type=jnp.float32)
        z = z + b2_ref[...]

        h_new = _layer_norm(y + z, g2_ref[...], be2_ref[...])
        h_ref[...] = h_new

        @pl.when(l == pl.num_programs(1) - 1)
        def _():
            o_ref[...] = h_new.astype(o_ref.dtype)

    in_specs = [
        pl.BlockSpec((TM, D), lambda i, l: (i, 0)),                 # x (bf16)
        pl.BlockSpec((None, D, 3 * D), lambda i, l: (l, 0, 0)),     # wqkv
        pl.BlockSpec((None, 1, 3 * D), lambda i, l: (l, 0, 0)),     # bqkv
        pl.BlockSpec((None, D, D), lambda i, l: (l, 0, 0)),         # wo
        pl.BlockSpec((None, 1, D), lambda i, l: (l, 0, 0)),         # bo
        pl.BlockSpec((None, 1, D), lambda i, l: (l, 0, 0)),         # g1
        pl.BlockSpec((None, 1, D), lambda i, l: (l, 0, 0)),         # be1
        pl.BlockSpec((None, D, MLP), lambda i, l: (l, 0, 0)),       # w1
        pl.BlockSpec((None, 1, MLP), lambda i, l: (l, 0, 0)),       # b1
        pl.BlockSpec((None, MLP, D), lambda i, l: (l, 0, 0)),       # w2
        pl.BlockSpec((None, 1, D), lambda i, l: (l, 0, 0)),         # b2
        pl.BlockSpec((None, 1, D), lambda i, l: (l, 0, 0)),         # g2
        pl.BlockSpec((None, 1, D), lambda i, l: (l, 0, 0)),         # be2
    ]

    return pl.pallas_call(
        kernel,
        out_shape=jax.ShapeDtypeStruct((R, D), jnp.bfloat16),
        grid=(num_i, NL),
        in_specs=in_specs,
        out_specs=pl.BlockSpec((TM, D), lambda i, l: (i, 0)),
        scratch_shapes=[pltpu.VMEM((TM, D), jnp.float32)],          # activation
        compiler_params=pltpu.CompilerParams(
            dimension_semantics=("parallel", "arbitrary"),
            vmem_limit_bytes=vmem_limit),
    )


# ---------------- final LayerNorm + mean over tokens (dim=1) ----------------
# Tiled over the token axis with a (B, D) VMEM accumulator so it pipelines at
# real sizes instead of loading one giant (S, B, D) block.

def make_final_fn(S, B, D, TSF):
    inv_s = 1.0 / S

    def kernel(x_ref, g_ref, b_ref, o_ref, acc_ref):
        i = pl.program_id(0)

        @pl.when(i == 0)
        def _():
            acc_ref[...] = jnp.zeros_like(acc_ref)

        y = _layer_norm(x_ref[...].astype(jnp.float32),
                        g_ref[...], b_ref[...])            # (TSF, B, D)
        acc_ref[...] += jnp.sum(y, axis=0)

        @pl.when(i == pl.num_programs(0) - 1)
        def _():
            o_ref[...] = acc_ref[...] * inv_s

    return pl.pallas_call(
        kernel,
        out_shape=jax.ShapeDtypeStruct((B, D), jnp.float32),
        grid=(S // TSF,),
        in_specs=[pl.BlockSpec((TSF, B, D), lambda i: (i, 0, 0)),
                  pl.BlockSpec((1, D), lambda i: (0, 0)),
                  pl.BlockSpec((1, D), lambda i: (0, 0))],
        out_specs=pl.BlockSpec((B, D), lambda i: (0, 0)),
        scratch_shapes=[pltpu.VMEM((B, D), jnp.float32)],
        compiler_params=pltpu.CompilerParams(
            dimension_semantics=("arbitrary",)),
    )


# --------------------------------- forward ----------------------------------

def vit_forward(x, params, patch_size, num_heads):
    B = x.shape[0]
    D = params['w_pe'].shape[1]
    MLP = params['layers'][0]['w1'].shape[1]
    NL = len(params['layers'])
    NH = num_heads
    assert D % NH == 0
    HD = D // NH
    scale = 1.0 / math.sqrt(HD)

    patches = extract_patches(x, patch_size)                 # (B, NP, K)
    NP, K = patches.shape[1], patches.shape[2]
    S = NP + 1
    vmem_limit = _vmem_limit_bytes()

    # rows ordered (token s major, image b minor) -> patch p lands at rows
    # (p+1)*B + b once the cls group is prepended.
    prows = patches.transpose(1, 0, 2).reshape(NP * B, K).astype(jnp.bfloat16)
    pos_patch = params['pos'][0, 1:, :]                      # (NP, D), no repeat

    TP = _patch_tile(NP, B)
    embed = make_patch_embed_fn(NP, B, K, D, TP)
    tok_rows = embed(prows, params['w_pe'].astype(jnp.bfloat16),
                     params['b_pe'], pos_patch)              # (NP*B, D) bf16

    cls_rows = jnp.broadcast_to(
        (params['cls'][0, 0, :] + params['pos'][0, 0, :]).astype(jnp.bfloat16),
        (B, D))
    xe = jnp.concatenate([cls_rows, tok_rows], axis=0)       # (S*B, D) bf16

    # stack per-layer weights -> single pallas_call with a layer grid axis;
    # fold the 1/sqrt(HD) attention scale into the Q projection here.
    L = params['layers']
    wqkv = jnp.stack([jnp.concatenate([l['wq'] * scale, l['wk'], l['wv']], axis=1)
                      for l in L]).astype(jnp.bfloat16)      # (NL, D, 3D)
    bqkv = jnp.stack([jnp.concatenate([l['bq'] * scale, l['bk'], l['bv']], axis=1)
                      for l in L])                           # (NL, 1, 3D)
    wo = jnp.stack([l['wo'] for l in L]).astype(jnp.bfloat16)
    bo = jnp.stack([l['bo'] for l in L])
    g1 = jnp.stack([l['g1'] for l in L])
    be1 = jnp.stack([l['be1'] for l in L])
    w1 = jnp.stack([l['w1'] for l in L]).astype(jnp.bfloat16)
    b1 = jnp.stack([l['b1'] for l in L])
    w2 = jnp.stack([l['w2'] for l in L]).astype(jnp.bfloat16)
    b2 = jnp.stack([l['b2'] for l in L])
    g2 = jnp.stack([l['g2'] for l in L])
    be2 = jnp.stack([l['be2'] for l in L])

    TS = _group_tile(S, B)
    enc = make_encoder_stack_fn(S, B, D, NH, MLP, NL, TS, vmem_limit)
    henc = enc(xe, wqkv, bqkv, wo, bo, g1, be1, w1, b1, w2, b2, g2, be2)

    TSF = _final_tile(S, B, D)
    final = make_final_fn(S, B, D, TSF)
    return final(henc.reshape(S, B, D), params['gf'], params['bf'])   # (B, D)


# ----------------------------------- main ------------------------------------

if __name__ == "__main__":
    B, C, IMG, P = 2, 3, 16, 8
    D, NH, MLP, NL = 32, 4, 64, 2
    NP = (IMG // P) ** 2
    S = NP + 1

    key = jax.random.PRNGKey(0)
    keys = jax.random.split(key, 128)
    kit = iter(keys)

    def rnd(shape, scale=0.02):
        return scale * jax.random.normal(next(kit), shape, dtype=jnp.float32)

    x = jax.random.normal(next(kit), (B, C, IMG, IMG), dtype=jnp.float32)

    params = dict(
        w_pe=rnd((C * P * P, D)), b_pe=rnd((1, D)),
        cls=rnd((1, 1, D)), pos=rnd((1, S, D)),
        gf=jnp.ones((1, D), jnp.float32), bf=jnp.zeros((1, D), jnp.float32),
        layers=[dict(
            wq=rnd((D, D)), bq=rnd((1, D)),
            wk=rnd((D, D)), bk=rnd((1, D)),
            wv=rnd((D, D)), bv=rnd((1, D)),
            wo=rnd((D, D)), bo=rnd((1, D)),
            g1=jnp.ones((1, D), jnp.float32), be1=jnp.zeros((1, D), jnp.float32),
            w1=rnd((D, MLP)), b1=rnd((1, MLP)),
            w2=rnd((MLP, D)), b2=rnd((1, D)),
            g2=jnp.ones((1, D), jnp.float32), be2=jnp.zeros((1, D), jnp.float32),
        ) for _ in range(NL)],
    )

    out = vit_forward(x, params, patch_size=P, num_heads=NH)
    out = jax.block_until_ready(out)
    assert out.shape == (B, D)
    assert bool(jnp.all(jnp.isfinite(out)))
    print("KERNEL_OK")
</pallas_src>

<mosaic_0001>
module attributes {stable_mosaic.version = 11 : i64} {
  func.func @_embed_kernel(%arg0: i32, %arg1: memref<8x192xbf16, #tpu.memory_space<vmem>>, %arg2: memref<192x32xbf16, #tpu.memory_space<vmem>>, %arg3: memref<1x32xf32, #tpu.memory_space<vmem>>, %arg4: memref<4x32xf32, #tpu.memory_space<vmem>>, %arg5: memref<8x32xbf16, #tpu.memory_space<vmem>>) attributes {dimension_semantics = [#tpu.dimension_semantics<parallel>], iteration_bounds = array<i64: 1>, scalar_prefetch = 0 : i64, scratch_operands = 0 : i64, tpu.core_type = #tpu.core_type<tc>, window_params = [{transform_indices = @transform_0, window_bounds = array<i64: 8, 192>}, {pipeline_mode = #tpu.pipeline_mode<synchronous>, transform_indices = @transform_1, window_bounds = array<i64: 192, 32>}, {pipeline_mode = #tpu.pipeline_mode<synchronous>, transform_indices = @transform_2, window_bounds = array<i64: 1, 32>}, {transform_indices = @transform_3, window_bounds = array<i64: 4, 32>}, {transform_indices = @transform_4, window_bounds = array<i64: 8, 32>}]} {
    %c0 = arith.constant 0 : index
    %c0_0 = arith.constant 0 : index
    %0 = vector.load %arg1[%c0, %c0_0] : memref<8x192xbf16, #tpu.memory_space<vmem>>, vector<8x192xbf16>
    %c0_1 = arith.constant 0 : index
    %c0_2 = arith.constant 0 : index
    %1 = vector.load %arg2[%c0_1, %c0_2] : memref<192x32xbf16, #tpu.memory_space<vmem>>, vector<192x32xbf16>
    %cst = arith.constant dense<0.000000e+00> : vector<8x32xf32>
    %2 = tpu.matmul %0, %1, %cst {dimension_numbers = #tpu.dot_dimension_numbers<[1], [0], [0], [1], [0, 0, 1, 1], [], []>} : vector<8x192xbf16>, vector<192x32xbf16>, vector<8x32xf32> -> vector<8x32xf32>
    %c0_3 = arith.constant 0 : index
    %c0_4 = arith.constant 0 : index
    %3 = vector.load %arg3[%c0_3, %c0_4] : memref<1x32xf32, #tpu.memory_space<vmem>>, vector<1x32xf32>
    %4 = vector.broadcast %3 : vector<1x32xf32> to vector<8x32xf32>
    %5 = arith.addf %2, %4 : vector<8x32xf32>
    %c0_5 = arith.constant 0 : index
    %c0_6 = arith.constant 0 : index
    %6 = vector.load %arg4[%c0_5, %c0_6] : memref<4x32xf32, #tpu.memory_space<vmem>>, vector<4x32xf32>
    %7 = vector.shape_cast %6 : vector<4x32xf32> to vector<4x1x32xf32>
    %8 = vector.shape_cast %7 : vector<4x1x32xf32> to vector<4x1x32xf32>
    %9 = vector.broadcast %8 : vector<4x1x32xf32> to vector<4x2x32xf32>
    %10 = vector.shape_cast %9 : vector<4x2x32xf32> to vector<8x32xf32>
    %11 = arith.addf %5, %10 : vector<8x32xf32>
    %12 = arith.truncf %11 : vector<8x32xf32> to vector<8x32xbf16>
    %c0_7 = arith.constant 0 : index
    %c0_8 = arith.constant 0 : index
    %13 = vector.load %arg5[%c0_7, %c0_8] : memref<8x32xbf16, #tpu.memory_space<vmem>>, vector<8x32xbf16>
    tpu.vector_store %arg5[%c0_7, %c0_8], %12 {strides = array<i32>} : memref<8x32xbf16, #tpu.memory_space<vmem>>, vector<8x32xbf16>,
    return
  }
  func.func @transform_0(%arg0: i32) -> (i32, i32) {
    %c0_i32 = arith.constant 0 : i32
    %c0_i32_0 = arith.constant 0 : i32
    return %arg0, %c0_i32 : i32, i32
  }
  func.func @transform_1(%arg0: i32) -> (i32, i32) {
    %c0_i32 = arith.constant 0 : i32
    %c0_i32_0 = arith.constant 0 : i32
    %c0_i32_1 = arith.constant 0 : i32
    return %c0_i32, %c0_i32_0 : i32, i32
  }
  func.func @transform_2(%arg0: i32) -> (i32, i32) {
    %c0_i32 = arith.constant 0 : i32
    %c0_i32_0 = arith.constant 0 : i32
    %c0_i32_1 = arith.constant 0 : i32
    return %c0_i32, %c0_i32_0 : i32, i32
  }
  func.func @transform_3(%arg0: i32) -> (i32, i32) {
    %c0_i32 = arith.constant 0 : i32
    %c0_i32_0 = arith.constant 0 : i32
    return %arg0, %c0_i32 : i32, i32
  }
  func.func @transform_4(%arg0: i32) -> (i32, i32) {
    %c0_i32 = arith.constant 0 : i32
    %c0_i32_0 = arith.constant 0 : i32
    return %arg0, %c0_i32 : i32, i32
  }
}

</mosaic_0001>

<llo_original>
// kernel: tpu_custom_call.1
$region0: #{tpu_custom_call.1}
  #allocation0 [shape = 'u32[]', space=smem, size = 0x4, offset = 0x4, fixed_abs, tag = 'smem constant byte address 0x4 - core index']
  #allocation1 [shape = 'u32[72,128]{1,0:T(1,128)}', space=vmem, size = 0x9000, scoped, tag = 'internal scratch']
  %s0 = inlined_call_operand.vmem [shape: bf16[8,192], index: 0, kind: input, shape index: {}]
  %s1 = inlined_call_operand.vmem [shape: bf16[192,32], index: 1, kind: input, shape index: {}]
  %s2 = inlined_call_operand.vmem [shape: f32[1,32], index: 2, kind: input, shape index: {}]
  %s3 = inlined_call_operand.vmem [shape: f32[4,32], index: 3, kind: input, shape index: {}]
  %s4 = inlined_call_operand.hbm [shape: bf16[8,32], index: 4, kind: output, shape index: {}]
  %s5 = sld [smem:[#allocation0]]
  $region26: #{tpu_custom_call.1} parent=0
    _
  %s7 = ssub.s32 1, %s5
  %s8 = scalar_select 0, %s7, %s5
  $region1: #{tpu_custom_call.1} parent=0
    #allocation2 [shape = 'u8[2048]{0}', space=vmem, size = 0x800, scoped, tag = 'output window, operand 0, single buffered']
    #allocation3 [shape = 's32[1]{0}', space=sflag, size = 0x4, scoped, tag = 'scoped memory for tpu_custom_call.1']
    %9 = vsyncpa [#allocation3], 0
    // Predicated region
    $region2: #{tpu_custom_call.1} parent=1 // pred_check
      _
    $region3: #{tpu_custom_call.1} parent=1 // pred_check_branch
      %11 = sbr.rel (0) target = $region5
    $region4: #{tpu_custom_call.1} parent=1 // pred_region
      _
    $region5: #{tpu_custom_call.1} parent=1 // pred_fallthru
      _
    // Predicated region
    $region6: #{tpu_custom_call.1} parent=1 // pred_check
      _
    $region7: #{tpu_custom_call.1} parent=1 // pred_check_branch
      %13 = sbr.rel (0) target = $region9
    $region8: #{tpu_custom_call.1} parent=1 // pred_region
      _
    $region9: #{tpu_custom_call.1} parent=1 // pred_fallthru
      _
    // Predicated region
    $region10: #{tpu_custom_call.1} parent=1 // pred_check
      _
    $region11: #{tpu_custom_call.1} parent=1 // pred_check_branch
      %15 = sbr.rel (0) target = $region13
    $region12: #{tpu_custom_call.1} parent=1 // pred_region
      _
    $region13: #{tpu_custom_call.1} parent=1 // pred_fallthru
      _
    // Predicated region
    $region14: #{tpu_custom_call.1} parent=1 // pred_check
      _
    $region15: #{tpu_custom_call.1} parent=1 // pred_check_branch
      %17 = sbr.rel (0) target = $region17
    $region16: #{tpu_custom_call.1} parent=1 // pred_region
      _
    $region17: #{tpu_custom_call.1} parent=1 // pred_fallthru
      _
    %v19 = vld [vmem:[%s0] sm:$0xff]
    %v20 = vld [vmem:[%s1] sm:$0xf]
    %v21 = vld [vmem:[%s1 + $0x4] sm:$0xf]
    %v22 = vld [vmem:[%s1 + $0x8] sm:$0xf]
    %v23 = vld [vmem:[%s1 + $0xc] sm:$0xf]
    %v24 = vld [vmem:[%s1 + $0x10] sm:$0xf]
    %v25 = vld [vmem:[%s1 + $0x14] sm:$0xf]
    %v26 = vld [vmem:[%s1 + $0x18] sm:$0xf]
    %v27 = vld [vmem:[%s1 + $0x1c] sm:$0xf]
    %v28 = vld [vmem:[%s1 + $0x20] sm:$0xf]
    %v29 = vld [vmem:[%s1 + $0x24] sm:$0xf]
    %v30 = vld [vmem:[%s1 + $0x28] sm:$0xf]
    %v31 = vld [vmem:[%s1 + $0x2c] sm:$0xf]
    %v32 = vld [vmem:[%s1 + $0x30] sm:$0xf]
    %v33 = vld [vmem:[%s1 + $0x34] sm:$0xf]
    %v34 = vld [vmem:[%s1 + $0x38] sm:$0xf]
    %v35 = vld [vmem:[%s1 + $0x3c] sm:$0xf]
    %v36 = vld [vmem:[%s1 + $0x40] sm:$0xf]
    %v37 = vld [vmem:[%s1 + $0x44] sm:$0xf]
    %v38 = vld [vmem:[%s1 + $0x48] sm:$0xf]
    %v39 = vld [vmem:[%s1 + $0x4c] sm:$0xf]
    %v40 = vld [vmem:[%s1 + $0x50] sm:$0xf]
    %v41 = vld [vmem:[%s1 + $0x54] sm:$0xf]
    %v42 = vld [vmem:[%s1 + $0x58] sm:$0xf]
    %v43 = vld [vmem:[%s1 + $0x5c] sm:$0xf]
    %v44 = vld [vmem:[%s2] sm:$0x1]
    %v46 = vperm.slane %v44, 0
    %v49 = vunpack.c.l.b16 %v19
    %v50 = vunpack.c.h.b16 %v19
    %v51 = vpack.c.b16 %v49, %v49
    %v52 = vpack.c.b16 %v50, %v50
    %v78 = vunpack.c.l.b16 %v20
    %v79 = vunpack.c.l.b16 %v21
    %v80 = vunpack.c.l.b16 %v22
    %v81 = vunpack.c.l.b16 %v23
    %v82 = vunpack.c.l.b16 %v24
    %v83 = vunpack.c.l.b16 %v25
    %v84 = vunpack.c.l.b16 %v26
    %v85 = vunpack.c.l.b16 %v27
    %v86 = vunpack.c.l.b16 %v28
    %v87 = vunpack.c.l.b16 %v29
    %v88 = vunpack.c.l.b16 %v30
    %v89 = vunpack.c.l.b16 %v31
    %v90 = vunpack.c.l.b16 %v32
    %v91 = vunpack.c.l.b16 %v33
    %v92 = vunpack.c.l.b16 %v34
    %v93 = vunpack.c.l.b16 %v35
    %v94 = vunpack.c.l.b16 %v36
    %v95 = vunpack.c.l.b16 %v37
    %v96 = vunpack.c.l.b16 %v38
    %v97 = vunpack.c.l.b16 %v39
    %v98 = vunpack.c.l.b16 %v40
    %v99 = vunpack.c.l.b16 %v41
    %v100 = vunpack.c.l.b16 %v42
    %v101 = vunpack.c.l.b16 %v43
    %v102 = vpack.c.b16 %v79, %v78
    %v103 = vpack.c.b16 %v81, %v80
    %v104 = vpack.c.b16 %v83, %v82
    %v105 = vpack.c.b16 %v85, %v84
    %v106 = vpack.c.b16 %v87, %v86
    %v107 = vpack.c.b16 %v89, %v88
    %v108 = vpack.c.b16 %v91, %v90
    %v109 = vpack.c.b16 %v93, %v92
    %v110 = vpack.c.b16 %v95, %v94
    %v111 = vpack.c.b16 %v97, %v96
    %v112 = vpack.c.b16 %v99, %v98
    %v113 = vpack.c.b16 %v101, %v100
    %vm126 = vcmask 523264
    %v128 = vsel %vm126, %v52, 0
    %130 = vmatpush.bf16.msra.mxu0 %v109
    %131 = vmatpush.bf16.msra.mxu0 %v108
    %132 = vmatpush.bf16.msra.mxu0 %v107
    %133 = vmatpush.bf16.msra.mxu0 %v106
    %134 = vmatpush.bf16.msra.mxu0 %v105
    %135 = vmatpush.bf16.msra.mxu0 %v104
    %136 = vmatpush.bf16.msra.mxu0 %v103
    %137 = vmatpush.bf16.msra.mxu0 %v102
    %138 = vmatmul.bf16.gmra.mxu0 %v51
    %v139 = vpop.f32.mrf.mxu0
    %v140 = vadd.f32 %v46, %v139
    %v141 = vpop.f32.mrf.mxu0
    %142 = vdwg.mxu0
    %143 = vmatpush.bf16.msra.mxu0 0
    %144 = vmatpush.bf16.msra.mxu0 0
    %145 = vmatpush.bf16.msra.mxu0 0
    %146 = vmatpush.bf16.msra.mxu0 0
    %147 = vmatpush.bf16.msra.mxu0 %v113
    %148 = vmatpush.bf16.msra.mxu0 %v112
    %149 = vmatpush.bf16.msra.mxu0 %v111
    %150 = vmatpush.bf16.msra.mxu0 %v110
    %151 = vmatmul.bf16.gmra.mxu0 %v128
    %v152 = vpop.f32.mrf.mxu0
    %v153 = vadd.f32 %v140, %v152
    %v154 = vpop.f32.mrf.mxu0
    %155 = vdwg.mxu0
    %v156 = vld [vmem:[%s3] sm:$0xf]
    %v158 = vrot.slane %v156, 1
    %v159 = vrot.slane %v156, 2
    %v160 = vrot.slane %v156, 3
    %v161 = vperm.slane %v156, 0
    %v162 = vperm.slane %v158, 0
    %v163 = vperm.slane %v159, 0
    %v164 = vperm.slane %v160, 0
    %165 = vst [vmem:[#allocation1] ss:$4 sm:$0xff] %v161
    %s166 = scalar_lea.vmem [#allocation1], 1
    %167 = vst [vmem:[%s166] ss:$4 sm:$0xff] %v162
    %s168 = scalar_lea.vmem [#allocation1], 2
    %169 = vst [vmem:[%s168] ss:$4 sm:$0xff] %v163
    %s170 = scalar_lea.vmem [#allocation1], 3
    %171 = vst [vmem:[%s170] ss:$4 sm:$0xff] %v164
    %v172 = vld.sshfl [vmem:[#allocation1] sm:$0xff pattern:$0x73625140]
    %v174 = vadd.f32 %v153, %v172
    %v175 = vpack.c.bf16 %v174, %v174
    %vm176 = vcmask 257024
    %177 = vst.msk [vmem:[#allocation2] sm:$0xf] %vm176, %v175
    // Predicated region
    $region18: #{tpu_custom_call.1} parent=1 // pred_check
      _
    $region19: #{tpu_custom_call.1} parent=1 // pred_check_branch
      %179 = sbr.rel (0) target = $region21
    $region20: #{tpu_custom_call.1} parent=1 // pred_region
      %181 = vsyncadd [#allocation3], 0
      %s183 = sshll.u32 [#allocation2], 4
      %s184 = int_to_ptr.vmem [resolvable:$true] %s183
      %s185 = sshll.u32 %s4, 4
      %s186 = int_to_ptr.hbm [resolvable:$true] %s185
      %188 = dma.vmem_to_hbm [thread:$0]  %s184, 64, %s186, [#allocation3]
    $region21: #{tpu_custom_call.1} parent=1 // pred_fallthru
      _
    // Predicated region
    $region22: #{tpu_custom_call.1} parent=1 // pred_check
      _
    $region23: #{tpu_custom_call.1} parent=1 // pred_check_branch
      %190 = sbr.rel (0) target = $region25
    $region24: #{tpu_custom_call.1} parent=1 // pred_region
      %192 = dma.done [#allocation3], 64
    $region25: #{tpu_custom_call.1} parent=1 // pred_fallthru
      _
    %193 = vsyncpa [#allocation3], 1

</llo_original>
